<compile_context>
chip_gen: v7x
topology: tpu7x:2x2x1
jax: 0.10.0
libtpu: 0.0.40
codegen_flags: <defaults>
</compile_context>

<pallas_src>
import functools

import jax
import jax.numpy as jnp
from jax.experimental import pallas as pl
from jax.experimental.pallas import tpu as pltpu

LANE = 128  # TPU lane width; also >= both hidden widths (64) and action dim.


def _round_up(x, m):
    return (x + m - 1) // m * m


def _policy_kernel(x_ref, w_ref, o_ref, *, state_dim, s_pad):
    """One batch tile of tanh(MLP(x)).

    Packed weight slab `w_ref` layout (all rows 128 lanes wide):
      [0              : state_dim     ] W1  (state_dim, 128)  cols >= H1 zero
      [s_pad          : s_pad + 128   ] W2  (128, 128)        rows/cols >= H zero
      [s_pad + 128    : s_pad + 256   ] W3  (128, 128)        rows >= H, cols >= A zero
      [s_pad + 256    : s_pad + 264   ] biases (8, 128): row0=b1, row1=b2, row2=b3
    """
    f32 = jnp.float32
    cdt = w_ref.dtype  # compute/stream dtype of the slab (bf16 in production)

    w1 = w_ref[0:state_dim, :]
    w2 = w_ref[s_pad:s_pad + LANE, :]
    w3 = w_ref[s_pad + LANE:s_pad + 2 * LANE, :]
    b = w_ref[s_pad + 2 * LANE:s_pad + 2 * LANE + 8, :].astype(f32)
    b1 = b[0:1, :]
    b2 = b[1:2, :]
    b3 = b[2:3, :]

    x = x_ref[...].astype(cdt)
    # Layer 1: Linear + Tanh (zero-padded weight lanes -> tanh(0) = 0, harmless).
    h1 = jnp.tanh(jnp.dot(x, w1, preferred_element_type=f32) + b1)
    # Layer 2: Linear + Tanh.
    h2 = jnp.tanh(jnp.dot(h1.astype(cdt), w2, preferred_element_type=f32) + b2)
    # Output layer, then the module-level tanh.  Lane-dense (128-wide) store;
    # the wrapper slices the first `action_dim` columns.
    out = jnp.dot(h2.astype(cdt), w3, preferred_element_type=f32) + b3
    o_ref[...] = jnp.tanh(out).astype(o_ref.dtype)


def pack_params(params, *, dtype=jnp.bfloat16):
    """Pack W1/b1/W2/b2/W3/b3 into one zero-padded [s_pad + 264, 128] slab.

    Call this ONCE per parameter set (outside the per-step forward / the jitted
    rollout loop) and reuse the result; rebuilding the slab every call puts a
    chain of small host/XLA updates on the critical path of a microsecond-scale
    kernel.
    """
    S, h1 = params["w1"].shape
    h2 = params["w2"].shape[1]
    A = params["w3"].shape[1]
    assert h1 <= LANE and h2 <= LANE and A <= LANE, "widths must fit 128 lanes"
    s_pad = _round_up(S, 8)
    rows = s_pad + 2 * LANE + 8
    slab = jnp.zeros((rows, LANE), jnp.float32)
    slab = slab.at[0:S, 0:h1].set(params["w1"])
    slab = slab.at[s_pad:s_pad + h1, 0:h2].set(params["w2"])
    slab = slab.at[s_pad + LANE:s_pad + LANE + h2, 0:A].set(params["w3"])
    slab = slab.at[s_pad + 2 * LANE + 0, 0:h1].set(params["b1"][0])
    slab = slab.at[s_pad + 2 * LANE + 1, 0:h2].set(params["b2"][0])
    slab = slab.at[s_pad + 2 * LANE + 2, 0:A].set(params["b3"][0])
    return slab.astype(dtype)


def state_independent_policy_forward(
        states, slab, *, action_dim, tile_m=8192,
        out_dtype=jnp.float32, vmem_budget_bytes=16 * 1024 * 1024):
    """tanh(MLP(states)) in a single pipelined Pallas kernel.

    states:   [B, state_dim] (f32 or bf16)
    slab:     packed parameters from pack_params()
    returns:  [B, action_dim] in out_dtype, values in (-1, 1)

    Production notes:
      * keep tile_m large (4096-8192); tiny tiles leave the kernel at ~50% of
        the HBM roofline due to per-grid-step overhead.
      * pass out_dtype=jnp.bfloat16 if downstream tolerates it: the padded
        128-lane f32 output dominates HBM traffic on this writeback-bound
        kernel, so halving it is ~1.7-1.9x end-to-end.
    """
    B, S = states.shape
    rows = slab.shape[0]
    s_pad = rows - 2 * LANE - 8
    assert s_pad == _round_up(S, 8), "packed slab does not match state_dim"

    # Tile selection: as large as possible, but double-buffered (input + output)
    # tiles must fit the VMEM budget -> same tile is safe on v7x (64 MiB phys /
    # 32 MiB scoped) and under v5e's 16 MiB scoped default.
    bytes_per_row = (S * states.dtype.itemsize
                     + LANE * jnp.dtype(out_dtype).itemsize)
    vmem_cap_rows = max(8, (vmem_budget_bytes // (2 * bytes_per_row)) // 8 * 8)
    tm = min(_round_up(min(tile_m, B), 8), vmem_cap_rows)
    grid = pl.cdiv(B, tm)  # trailing partial block handled by Pallas masking

    kernel = functools.partial(_policy_kernel, state_dim=S, s_pad=s_pad)

    out = pl.pallas_call(
        kernel,
        out_shape=jax.ShapeDtypeStruct((B, LANE), out_dtype),
        grid=(grid,),
        in_specs=[
            # Batch tile: streamed + double-buffered across the grid.
            pl.BlockSpec((tm, S), lambda i: (i, 0)),
            # Packed weight slab: same block every step -> VMEM-resident.
            # TODO(synk): pipeline_mode=pl.Buffered(1) would drop the redundant
            # second slab buffer (~145 KB bf16); left at default for portability.
            pl.BlockSpec((rows, LANE), lambda i: (0, 0)),
        ],
        # Lane-dense 128-wide output -> unmasked vector stores; sliced below.
        out_specs=pl.BlockSpec((tm, LANE), lambda i: (i, 0)),
        compiler_params=pltpu.CompilerParams(
            # On v7x, pltpu.CORE_PARALLEL guarantees 2-TensorCore sharding of
            # the batch axis; "parallel" is the portable choice here.
            dimension_semantics=("parallel",),
        ),
    )(states, slab)

    return out[:, :action_dim]


def init_params(key, state_dim, action_dim, hidden_units=(64, 64)):
    """Deterministic synthetic init (mimics PyTorch Linear uniform fan-in init)."""
    dims = [state_dim, *hidden_units, action_dim]
    params = {}
    keys = jax.random.split(key, len(dims) - 1)
    for i, (d_in, d_out) in enumerate(zip(dims[:-1], dims[1:]), start=1):
        bound = 1.0 / jnp.sqrt(d_in)
        kw, kb = jax.random.split(keys[i - 1])
        # stored as [in, out] (transposed vs. PyTorch's [out, in]) for x @ W
        params[f"w{i}"] = jax.random.uniform(
            kw, (d_in, d_out), jnp.float32, minval=-bound, maxval=bound)
        params[f"b{i}"] = jax.random.uniform(
            kb, (1, d_out), jnp.float32, minval=-bound, maxval=bound)
    # log_stds exists in the module but is unused by forward(); kept for fidelity.
    params["log_stds"] = jnp.zeros((1, action_dim), jnp.float32)
    return params


def reference_forward(states, params):
    h1 = jnp.tanh(states @ params["w1"] + params["b1"])
    h2 = jnp.tanh(h1 @ params["w2"] + params["b2"])
    return jnp.tanh(h2 @ params["w3"] + params["b3"])


if __name__ == "__main__":
    key = jax.random.PRNGKey(0)
    k_param, k_state = jax.random.split(key)

    batch = 200          # non-multiple of the test tile -> exercises boundary masking
    state_dim = 16
    action_dim = 6
    hidden_units = (64, 64)

    params = init_params(k_param, state_dim, action_dim, hidden_units)
    states = jax.random.normal(k_state, (batch, state_dim), jnp.float32)
    ref = reference_forward(states, params)

    # --- f32 path (numerically faithful), small tile so the grid has several
    #     steps incl. a partial trailing block (tests boundary handling). ---
    slab_f32 = pack_params(params, dtype=jnp.float32)
    fwd_f32 = jax.jit(functools.partial(
        state_independent_policy_forward, action_dim=action_dim, tile_m=64))
    actions = jax.block_until_ready(fwd_f32(states, slab_f32))
    assert actions.shape == (batch, action_dim)
    assert actions.dtype == jnp.float32
    assert jnp.allclose(actions, ref, atol=5e-5, rtol=5e-5)

    # --- production config: bf16 weights/inputs on the MXU + bf16 writeback,
    #     default large tile (single block at this tiny batch). ---
    slab_bf16 = pack_params(params)  # bf16 by default
    fwd_bf16 = jax.jit(functools.partial(
        state_independent_policy_forward, action_dim=action_dim,
        out_dtype=jnp.bfloat16))
    actions_bf16 = jax.block_until_ready(fwd_bf16(states, slab_bf16))
    assert actions_bf16.shape == (batch, action_dim)
    assert actions_bf16.dtype == jnp.bfloat16
    assert jnp.allclose(actions_bf16.astype(jnp.float32), ref,
                        atol=5e-2, rtol=5e-2)

    print("KERNEL_OK")
</pallas_src>

<mosaic_0001>
module attributes {stable_mosaic.version = 11 : i64} {
  func.func @_policy_kernel(%arg0: i32, %arg1: memref<64x16xf32, #tpu.memory_space<vmem>>, %arg2: memref<280x128xf32, #tpu.memory_space<vmem>>, %arg3: memref<64x128xf32, #tpu.memory_space<vmem>>) attributes {dimension_semantics = [#tpu.dimension_semantics<parallel>], iteration_bounds = array<i64: 4>, scalar_prefetch = 0 : i64, scratch_operands = 0 : i64, tpu.core_type = #tpu.core_type<tc>, window_params = [{transform_indices = @transform_0, window_bounds = array<i64: 64, 16>}, {pipeline_mode = #tpu.pipeline_mode<synchronous>, transform_indices = @transform_1, window_bounds = array<i64: 280, 128>}, {transform_indices = @transform_2, window_bounds = array<i64: 64, 128>}]} {
    %c0 = arith.constant 0 : index
    %c0_0 = arith.constant 0 : index
    %0 = vector.load %arg2[%c0, %c0_0] : memref<280x128xf32, #tpu.memory_space<vmem>>, vector<16x128xf32>
    %c16 = arith.constant 16 : index
    %c0_1 = arith.constant 0 : index
    %1 = vector.load %arg2[%c16, %c0_1] : memref<280x128xf32, #tpu.memory_space<vmem>>, vector<128x128xf32>
    %c144 = arith.constant 144 : index
    %c0_2 = arith.constant 0 : index
    %2 = vector.load %arg2[%c144, %c0_2] : memref<280x128xf32, #tpu.memory_space<vmem>>, vector<128x128xf32>
    %c272 = arith.constant 272 : index
    %c0_3 = arith.constant 0 : index
    %3 = vector.load %arg2[%c272, %c0_3] : memref<280x128xf32, #tpu.memory_space<vmem>>, vector<8x128xf32>
    %4 = vector.extract_strided_slice %3 {offsets = [0, 0], sizes = [1, 128], strides = [1, 1]} : vector<8x128xf32> to vector<1x128xf32>
    %5 = vector.extract_strided_slice %3 {offsets = [1, 0], sizes = [1, 128], strides = [1, 1]} : vector<8x128xf32> to vector<1x128xf32>
    %6 = vector.extract_strided_slice %3 {offsets = [2, 0], sizes = [1, 128], strides = [1, 1]} : vector<8x128xf32> to vector<1x128xf32>
    %c0_4 = arith.constant 0 : index
    %c0_5 = arith.constant 0 : index
    %7 = vector.load %arg1[%c0_4, %c0_5] : memref<64x16xf32, #tpu.memory_space<vmem>>, vector<64x16xf32>
    %cst = arith.constant dense<0.000000e+00> : vector<64x128xf32>
    %8 = tpu.matmul %7, %0, %cst {dimension_numbers = #tpu.dot_dimension_numbers<[1], [0], [0], [1], [0, 0, 1, 1], [], []>} : vector<64x16xf32>, vector<16x128xf32>, vector<64x128xf32> -> vector<64x128xf32>
    %9 = vector.broadcast %4 : vector<1x128xf32> to vector<64x128xf32>
    %10 = arith.addf %8, %9 : vector<64x128xf32>
    %11 = math.tanh %10 : vector<64x128xf32>
    %cst_6 = arith.constant dense<0.000000e+00> : vector<64x128xf32>
    %12 = tpu.matmul %11, %1, %cst_6 {dimension_numbers = #tpu.dot_dimension_numbers<[1], [0], [0], [1], [0, 0, 1, 1], [], []>} : vector<64x128xf32>, vector<128x128xf32>, vector<64x128xf32> -> vector<64x128xf32>
    %13 = vector.broadcast %5 : vector<1x128xf32> to vector<64x128xf32>
    %14 = arith.addf %12, %13 : vector<64x128xf32>
    %15 = math.tanh %14 : vector<64x128xf32>
    %cst_7 = arith.constant dense<0.000000e+00> : vector<64x128xf32>
    %16 = tpu.matmul %15, %2, %cst_7 {dimension_numbers = #tpu.dot_dimension_numbers<[1], [0], [0], [1], [0, 0, 1, 1], [], []>} : vector<64x128xf32>, vector<128x128xf32>, vector<64x128xf32> -> vector<64x128xf32>
    %17 = vector.broadcast %6 : vector<1x128xf32> to vector<64x128xf32>
    %18 = arith.addf %16, %17 : vector<64x128xf32>
    %19 = math.tanh %18 : vector<64x128xf32>
    %c0_8 = arith.constant 0 : index
    %c0_9 = arith.constant 0 : index
    %20 = vector.load %arg3[%c0_8, %c0_9] : memref<64x128xf32, #tpu.memory_space<vmem>>, vector<64x128xf32>
    tpu.vector_store %arg3[%c0_8, %c0_9], %19 {strides = array<i32>} : memref<64x128xf32, #tpu.memory_space<vmem>>, vector<64x128xf32>,
    return
  }
  func.func @transform_0(%arg0: i32) -> (i32, i32) {
    %c0_i32 = arith.constant 0 : i32
    %c0_i32_0 = arith.constant 0 : i32
    return %arg0, %c0_i32 : i32, i32
  }
  func.func @transform_1(%arg0: i32) -> (i32, i32) {
    %c0_i32 = arith.constant 0 : i32
    %c0_i32_0 = arith.constant 0 : i32
    %c0_i32_1 = arith.constant 0 : i32
    return %c0_i32, %c0_i32_0 : i32, i32
  }
  func.func @transform_2(%arg0: i32) -> (i32, i32) {
    %c0_i32 = arith.constant 0 : i32
    %c0_i32_0 = arith.constant 0 : i32
    return %arg0, %c0_i32 : i32, i32
  }
}

</mosaic_0001>

<llo_original>
// kernel: state_independent_policy_forward.1
$region0: #{state_independent_policy_forward.1}
  #allocation0 [shape = 'u32[]', space=smem, size = 0x4, offset = 0x4, fixed_abs, tag = 'smem constant byte address 0x4 - core index']
  #allocation1 [shape = 'u32[144,128]{1,0:T(1,128)}', space=vmem, size = 0x12000, scoped, tag = 'internal scratch']
  %s0 = inlined_call_operand.vmem [shape: f32[200,16], index: 0, kind: input, shape index: {}]
  %s1 = inlined_call_operand.hbm [shape: f32[280,128], index: 1, kind: input, shape index: {}]
  %s2 = inlined_call_operand.vmem [shape: f32[200,128], index: 2, kind: output, shape index: {}]
  %s3 = sld [smem:[#allocation0]]
  $region93: #{state_independent_policy_forward.1} parent=0
    _
  %s5 = ssub.s32 1, %s3
  %s6 = scalar_select 0, %s5, %s3
  $region1: #{state_independent_policy_forward.1} parent=0
    #allocation2 [shape = 'u8[143360]{0}', space=vmem, size = 0x23000, scoped, tag = 'input window, operand 1, single buffered']
    #allocation3 [shape = 's32[2]{0}', space=sflag, size = 0x8, scoped, tag = 'scoped memory for state_independent_policy_forward.1']
    #allocation4 [shape = 'u8[65536]{0}', space=vmem, size = 0x10000, scoped, tag = 'output window, operand 0']
    %7 = vsyncpa [#allocation3], 0
    loop: start=0, step=1, limit=6
    $region2: #{state_independent_policy_forward.1} parent=1 // loop_pre_header
      _
    $region3: #{state_independent_policy_forward.1} parent=1 // loop_header
      %s9 = sphi 0, %s13
      %p10 = scmp.ge.s32.totalorder %s9, 6
      %s19 = sphi 0, %s21
      %s22 = sphi 0, %s19
      %s23 = sphi 0, %s22
      %s39 = sphi 0, %s23
      %s43 = sphi 0, %s43
      %s45 = sphi 0, %s43
      %s46 = sphi 0, %s45
      %s60 = sphi 0, %s46
      %s66 = sphi 0, %s68
      %s69 = sphi 0, %s66
      %s70 = sphi 0, %s69
      %s86 = sphi 0, %s70
    $region4: #{state_independent_policy_forward.1} parent=1 // loop_header_branch
      %12 = sbr.rel (%p10) target = $region8
    $region5: #{state_independent_policy_forward.1} parent=1 // loop_body
      %s14 = ssub.s32 %s9, 1
      %s15 = ssub.s32 %s9, 2
      %s16 = sadd.s32 %s9, 1
      %s17 = ssub.s32 %s9, %s16
      %p18 = scmp.eq.s32.totalorder %s17, 0
      %s20 = sadd.s32 %s19, 1
      %s21 = scalar_select %p18, %s19, %s20
      %p24 = pneg %p18
      %p25 = scmp.eq.s32.totalorder %s9, 3
      %p26 = por %p24, %p25
      %p27 = scmp.ne.s32.totalorder %s19, %s22
      %p28 = scmp.eq.s32.totalorder %s9, 0
      %p29 = por %p27, %p28
      %p30 = scmp.ne.s32.totalorder %s19, %s22
      %p31 = scmp.eq.s32.totalorder %s14, 3
      %p32 = por %p30, %p31
      %p33 = scmp.ne.s32.totalorder %s22, %s23
      %p34 = scmp.eq.s32.totalorder %s14, 0
      %p35 = por %p33, %p34
      %p36 = scmp.ne.s32.totalorder %s22, %s23
      %p37 = scmp.eq.s32.totalorder %s15, 3
      %p38 = por %p36, %p37
      %p40 = scmp.ne.s32.totalorder %s23, %s39
      %p41 = scmp.eq.s32.totalorder %s15, 0
      %p42 = por %p40, %p41
      %s44 = sadd.s32 %s43, 1
      %p47 = scmp.eq.s32.totalorder %s9, 3
      %p48 = scmp.ne.s32.totalorder %s43, %s45
      %p49 = scmp.eq.s32.totalorder %s9, 0
      %p50 = por %p48, %p49
      %p51 = scmp.ne.s32.totalorder %s43, %s45
      %p52 = scmp.eq.s32.totalorder %s14, 3
      %p53 = por %p51, %p52
      %p54 = scmp.ne.s32.totalorder %s45, %s46
      %p55 = scmp.eq.s32.totalorder %s14, 0
      %p56 = por %p54, %p55
      %p57 = scmp.ne.s32.totalorder %s45, %s46
      %p58 = scmp.eq.s32.totalorder %s15, 3
      %p59 = por %p57, %p58
      %p61 = scmp.ne.s32.totalorder %s46, %s60
      %p62 = scmp.eq.s32.totalorder %s15, 0
      %p63 = por %p61, %p62
      %s64 = ssub.s32 %s9, %s16
      %p65 = scmp.eq.s32.totalorder %s64, 0
      %s67 = sadd.s32 %s66, 1
      %s68 = scalar_select %p65, %s66, %s67
      %p71 = pneg %p65
      %p72 = scmp.eq.s32.totalorder %s9, 3
      %p73 = por %p71, %p72
      %p74 = scmp.ne.s32.totalorder %s66, %s69
      %p75 = scmp.eq.s32.totalorder %s9, 0
      %p76 = por %p74, %p75
      %p77 = scmp.ne.s32.totalorder %s66, %s69
      %p78 = scmp.eq.s32.totalorder %s14, 3
      %p79 = por %p77, %p78
      %p80 = scmp.ne.s32.totalorder %s69, %s70
      %p81 = scmp.eq.s32.totalorder %s14, 0
      %p82 = por %p80, %p81
      %p83 = scmp.ne.s32.totalorder %s69, %s70
      %p84 = scmp.eq.s32.totalorder %s15, 3
      %p85 = por %p83, %p84
      %p87 = scmp.ne.s32.totalorder %s70, %s86
      %p88 = scmp.eq.s32.totalorder %s15, 0
      %p89 = por %p87, %p88
      %p90 = scmp.le.s32.totalorder 1, %s9
      %p91 = scmp.lt.s32.totalorder %s9, 5
      %p92 = pnand %p90, %p91
      %p93 = pneg %p92
      // Predicated region
      $region9: #{state_independent_policy_forward.1} parent=5 // pred_check
        _
      $region10: #{state_independent_policy_forward.1} parent=5 // pred_check_branch
        %95 = sbr.rel (%p92) target = $region12
      $region11: #{state_independent_policy_forward.1} parent=5 // pred_region
        %s96 = ssub.s32 %s9, 1
        // Predicated region
        $region13: #{state_independent_policy_forward.1} parent=11 // pred_check
          %p97 = pneg %p56
        $region14: #{state_independent_policy_forward.1} parent=11 // pred_check_branch
          %99 = sbr.rel (%p97) target = $region16
        $region15: #{state_independent_policy_forward.1} parent=11 // pred_region
          %s101 = ssub.s32 4480, 4480
          %102 = vsyncadd [#allocation3], %s101
          %s103 = sshll.u32 [#allocation2], 4
          %s104 = int_to_ptr.vmem [resolvable:$true] %s103
          %109 = dma.hbm_to_vmem [thread:$0]  %s1, 4480, %s104, [#allocation3], 128, 128, 8
        $region16: #{state_independent_policy_forward.1} parent=11 // pred_fallthru
          _
      $region12: #{state_independent_policy_forward.1} parent=5 // pred_fallthru
        _
      %p110 = scmp.lt.s32.totalorder %s9, 4
      // Predicated region
      $region17: #{state_independent_policy_forward.1} parent=5 // pred_check
        %p111 = pneg %p110
      $region18: #{state_independent_policy_forward.1} parent=5 // pred_check_branch
        %113 = sbr.rel (%p111) target = $region20
      $region19: #{state_independent_policy_forward.1} parent=5 // pred_region
        // Predicated region
        $region21: #{state_independent_policy_forward.1} parent=19 // pred_check
          %p114 = pneg %p29
        $region22: #{state_independent_policy_forward.1} parent=19 // pred_check_branch
          %116 = sbr.rel (%p114) target = $region24
        $region23: #{state_independent_policy_forward.1} parent=19 // pred_region
          %s117 = smul.u32 8, %s9
          %s118 = ssub.s32 25, %s117
          %p119 = scmp.lt.s32.totalorder %s118, 8
          %s120 = scalar_select %p119, %s118, 8
          %s121 = smul.u32 128, %s120
          %p122 = scmp.lt.s32.totalorder %s117, 24
          %s123 = scalar_select %p122, %s117, 24
          %s124 = smul.addr %s123, 8
          %s125 = scalar_lea.vmem %s0, %s124
          %s126 = smul.u32 8, %s9
          %s127 = ssub.s32 25, %s126
          %p128 = scmp.lt.s32.totalorder %s127, 8
          %s129 = scalar_select %p128, %s127, 8
          %s130 = smul.u32 128, %s129
        $region24: #{state_independent_policy_forward.1} parent=19 // pred_fallthru
          _
      $region20: #{state_independent_policy_forward.1} parent=5 // pred_fallthru
        _
      %p131 = scmp.le.s32.totalorder 1, %s9
      %p132 = scmp.lt.s32.totalorder %s9, 5
      %p133 = pnand %p131, %p132
      %p134 = pneg %p133
      // Predicated region
      $region25: #{state_independent_policy_forward.1} parent=5 // pred_check
        _
      $region26: #{state_independent_policy_forward.1} parent=5 // pred_check_branch
        %136 = sbr.rel (%p133) target = $region28
      $region27: #{state_independent_policy_forward.1} parent=5 // pred_region
        %s137 = ssub.s32 %s9, 1
        // Predicated region
        $region29: #{state_independent_policy_forward.1} parent=27 // pred_check
          %p138 = pneg %p56
        $region30: #{state_independent_policy_forward.1} parent=27 // pred_check_branch
          %140 = sbr.rel (%p138) target = $region32
        $region31: #{state_independent_policy_forward.1} parent=27 // pred_region
          %141 = dma.done [#allocation3], 4480
        $region32: #{state_independent_policy_forward.1} parent=27 // pred_fallthru
          _
        %s142 = smul.u32 8, %s14
        %s143 = ssub.s32 25, %s142
        %p144 = scmp.lt.s32.totalorder %s143, 8
        %s145 = scalar_select %p144, %s143, 8
        %s146 = smul.u32 128, %s145
        %p147 = scmp.lt.s32.totalorder %s142, 24
        %s148 = scalar_select %p147, %s142, 24
        %s149 = smul.addr %s148, 8
        %s150 = scalar_lea.vmem %s0, %s149
        %p151 = pneg %p35
        %p152 = pneg %p32
        %p153 = pneg %p56
        %p154 = pneg %p53
        %p155 = pneg %p82
        %p156 = pneg %p79
        %s157 = sand.u32 %s69, 1
        %s158 = sand.u32 %s69, 1
        %s159 = smul.addr %s158, 64
        %s160 = scalar_lea.vmem [#allocation4], %s159
        %s161 = smul.u32 8, %s14
        %s162 = ssub.s32 25, %s161
        %p163 = scmp.lt.s32.totalorder %s162, 8
        %s164 = scalar_select %p163, %s162, 8
        %s165 = smul.u32 128, %s164
        %p166 = scmp.lt.s32.totalorder %s161, 24
        %s167 = scalar_select %p166, %s161, 24
        %s168 = smul.addr %s167, 8
        %s169 = scalar_lea.vmem %s0, %s168
        %s170 = smul.u32 8, %s14
        %s171 = ssub.s32 25, %s170
        %p172 = scmp.lt.s32.totalorder %s171, 8
        %s173 = scalar_select %p172, %s171, 8
        %s174 = smul.u32 128, %s173
        %s175 = smul.u32 8, %s14
        %s176 = ssub.s32 25, %s175
        %p177 = scmp.lt.s32.totalorder %s176, 8
        %s178 = scalar_select %p177, %s176, 8
        %s179 = smul.u32 128, %s178
        %v180 = vld [vmem:[#allocation2] sm:$0xff]
        %v181 = vld [vmem:[#allocation2 + $0x8] sm:$0xff]
        %v182 = vld [vmem:[#allocation2 + $0x10] sm:$0xff]
        %v183 = vld [vmem:[#allocation2 + $0x18] sm:$0xff]
        %v184 = vld [vmem:[#allocation2 + $0x20] sm:$0xff]
        %v185 = vld [vmem:[#allocation2 + $0x28] sm:$0xff]
        %v186 = vld [vmem:[#allocation2 + $0x30] sm:$0xff]
        %v187 = vld [vmem:[#allocation2 + $0x38] sm:$0xff]
        %v188 = vld [vmem:[#allocation2 + $0x40] sm:$0xff]
        %v189 = vld [vmem:[#allocation2 + $0x48] sm:$0xff]
        %v190 = vld [vmem:[#allocation2 + $0x50] sm:$0xff]
        %v191 = vld [vmem:[#allocation2 + $0x58] sm:$0xff]
        %v192 = vld [vmem:[#allocation2 + $0x60] sm:$0xff]
        %v193 = vld [vmem:[#allocation2 + $0x68] sm:$0xff]
        %v194 = vld [vmem:[#allocation2 + $0x70] sm:$0xff]
        %v195 = vld [vmem:[#allocation2 + $0x78] sm:$0xff]
        %v196 = vld [vmem:[#allocation2 + $0x80] sm:$0xff]
        %v197 = vld [vmem:[#allocation2 + $0x88] sm:$0xff]
        %v198 = vld [vmem:[#allocation2 + $0x90] sm:$0xff]
        %v199 = vld [vmem:[#allocation2 + $0x98] sm:$0xff]
        %v200 = vld [vmem:[#allocation2 + $0xa0] sm:$0xff]
        %v201 = vld [vmem:[#allocation2 + $0xa8] sm:$0xff]
        %v202 = vld [vmem:[#allocation2 + $0xb0] sm:$0xff]
        %v203 = vld [vmem:[#allocation2 + $0xb8] sm:$0xff]
        %v204 = vld [vmem:[#allocation2 + $0xc0] sm:$0xff]
        %v205 = vld [vmem:[#allocation2 + $0xc8] sm:$0xff]
        %v206 = vld [vmem:[#allocation2 + $0xd0] sm:$0xff]
        %v207 = vld [vmem:[#allocation2 + $0xd8] sm:$0xff]
        %v208 = vld [vmem:[#allocation2 + $0xe0] sm:$0xff]
        %v209 = vld [vmem:[#allocation2 + $0xe8] sm:$0xff]
        %v210 = vld [vmem:[#allocation2 + $0xf0] sm:$0xff]
        %v211 = vld [vmem:[#allocation2 + $0xf8] sm:$0xff]
        %v212 = vld [vmem:[#allocation2 + $0x100] sm:$0xff]
        %v213 = vld [vmem:[#allocation2 + $0x108] sm:$0xff]
        %v214 = vld [vmem:[#allocation2 + $0x110] sm:$0xff]
        %v215 = vld [vmem:[%s169] sm:$0xff]
        %v216 = vld [vmem:[%s169 + $0x8] sm:$0xff]
        %v217 = vld [vmem:[%s169 + $0x10] sm:$0xff]
        %v218 = vld [vmem:[%s169 + $0x18] sm:$0xff]
        %v219 = vld [vmem:[%s169 + $0x20] sm:$0xff]
        %v220 = vld [vmem:[%s169 + $0x28] sm:$0xff]
        %v221 = vld [vmem:[%s169 + $0x30] sm:$0xff]
        %v222 = vld [vmem:[%s169 + $0x38] sm:$0xff]
        %v223 = vlaneseq
        %v224 = vshrl.u32 %v223, 7
        %v225 = vsub.s32 0, %v224
        %v226 = vrot.slane %v214, %v225
        %vm227 = vcmask 130048
        %v229 = vsel %vm227, %v215, 0
        %v232 = vsel %vm227, %v216, 0
        %v235 = vsel %vm227, %v217, 0
        %v238 = vsel %vm227, %v218, 0
        %v241 = vsel %vm227, %v219, 0
        %v244 = vsel %vm227, %v220, 0
        %v247 = vsel %vm227, %v221, 0
        %v250 = vsel %vm227, %v222, 0
        %252 = vmatprep.subr.mxu0 0.0
        %253 = vmatpush1.msra.mxu0 %v180
        %254 = vmatprep.subr.mxu0 0.0
        %255 = vmatpush1.msra.mxu0 %v181
        %256 = vmatprep.subr.mxu0 0.0
        %257 = vmatpush1.msra.mxu0 0.0
        %258 = vmatprep.subr.mxu0 0.0
        %259 = vmatpush1.msra.mxu0 0.0
        %260 = vmatprep.subr.mxu0 0.0
        %261 = vmatpush1.msra.mxu0 0.0
        %262 = vmatprep.subr.mxu0 0.0
        %263 = vmatpush1.msra.mxu0 0.0
        %264 = vmatprep.subr.mxu0 0.0
        %265 = vmatpush1.msra.mxu0 0.0
        %266 = vmatprep.subr.mxu0 0.0
        %267 = vmatpush1.msra.mxu0 0.0
        %268 = vmatprep.subr.mxu0 0.0
        %269 = vmatpush1.msra.mxu0 0.0
        %270 = vmatprep.subr.mxu0 0.0
        %271 = vmatpush1.msra.mxu0 0.0
        %272 = vmatprep.subr.mxu0 0.0
        %273 = vmatpush1.msra.mxu0 0.0
        %274 = vmatprep.subr.mxu0 0.0
        %275 = vmatpush1.msra.mxu0 0.0
        %276 = vmatprep.subr.mxu0 0.0
        %277 = vmatpush1.msra.mxu0 0.0
        %278 = vmatprep.subr.mxu0 0.0
        %279 = vmatpush1.msra.mxu0 0.0
        %280 = vmatprep.subr.mxu0 0.0
        %281 = vmatpush1.msra.mxu0 0.0
        %282 = vmatprep.subr.mxu0 0.0
        %283 = vmatpush1.msra.mxu0 0.0
        %284 = vmatprep.subr.mxu0 0.0
        %285 = vmatpush1.msra.mxu0 0.0
        %286 = vmatprep.subr.mxu0 0.0
        %287 = vmatpush1.msra.mxu0 0.0
        %288 = vmatprep.subr.mxu0 0.0
        %289 = vmatpush1.msra.mxu0 0.0
        %290 = vmatprep.subr.mxu0 0.0
        %291 = vmatpush1.msra.mxu0 0.0
        %292 = vmatprep.subr.mxu0 0.0
        %293 = vmatpush1.msra.mxu0 0.0
        %294 = vmatprep.subr.mxu0 0.0
        %295 = vmatpush1.msra.mxu0 0.0
        %296 = vmatprep.subr.mxu0 0.0
        %297 = vmatpush1.msra.mxu0 0.0
        %298 = vmatprep.subr.mxu0 0.0
        %299 = vmatpush1.msra.mxu0 0.0
        %300 = vmatprep.subr.mxu0 0.0
        %301 = vmatpush1.msra.mxu0 0.0
        %302 = vmatprep.subr.mxu0 0.0
        %303 = vmatpush1.msra.mxu0 0.0
        %304 = vmatprep.subr.mxu0 0.0
        %305 = vmatpush1.msra.mxu0 0.0
        %306 = vmatprep.subr.mxu0 0.0
        %307 = vmatpush1.msra.mxu0 0.0
        %308 = vmatprep.subr.mxu0 0.0
        %309 = vmatpush1.msra.mxu0 0.0
        %310 = vmatprep.subr.mxu0 0.0
        %311 = vmatpush1.msra.mxu0 0.0
        %312 = vmatprep.subr.mxu0 0.0
        %313 = vmatpush1.msra.mxu0 0.0
        %314 = vmatprep.subr.mxu0 0.0
        %315 = vmatpush1.msra.mxu0 0.0
        %316 = vmatprep.mubr.f32.mxu0 0.0
        %317 = vmatmul.mubr.f32.gmra.mrb[0].mxu0 %v229
        %v318 = vpop.f32.mrb[0].mxu0
        %v319 = vadd.f32 %v226, %v318
        %v320 = vpop.f32.mrb[0].mxu0
        %321 = vmatprep.mubr.f32.mxu0 0.0
        %322 = vmatmul.mubr.f32.gmra.mrb[0].mxu0 %v232
        %v323 = vpop.f32.mrb[0].mxu0
        %v324 = vadd.f32 %v226, %v323
        %v325 = vpop.f32.mrb[0].mxu0
        %326 = vmatprep.mubr.f32.mxu0 0.0
        %327 = vmatmul.mubr.f32.gmra.mrb[0].mxu0 %v235
        %v328 = vpop.f32.mrb[0].mxu0
        %v329 = vadd.f32 %v226, %v328
        %v330 = vpop.f32.mrb[0].mxu0
        %331 = vmatprep.mubr.f32.mxu0 0.0
        %332 = vmatmul.mubr.f32.gmra.mrb[0].mxu0 %v238
        %v333 = vpop.f32.mrb[0].mxu0
        %v334 = vadd.f32 %v226, %v333
        %v335 = vpop.f32.mrb[0].mxu0
        %336 = vmatprep.mubr.f32.mxu0 0.0
        %337 = vmatmul.mubr.f32.gmra.mrb[0].mxu0 %v241
        %v338 = vpop.f32.mrb[0].mxu0
        %v339 = vadd.f32 %v226, %v338
        %v340 = vpop.f32.mrb[0].mxu0
        %341 = vmatprep.mubr.f32.mxu0 0.0
        %342 = vmatmul.mubr.f32.gmra.mrb[0].mxu0 %v244
        %v343 = vpop.f32.mrb[0].mxu0
        %v344 = vadd.f32 %v226, %v343
        %v345 = vpop.f32.mrb[0].mxu0
        %346 = vmatprep.mubr.f32.mxu0 0.0
        %347 = vmatmul.mubr.f32.gmra.mrb[0].mxu0 %v247
        %v348 = vpop.f32.mrb[0].mxu0
        %v349 = vadd.f32 %v226, %v348
        %v350 = vpop.f32.mrb[0].mxu0
        %351 = vmatprep.mubr.f32.mxu0 0.0
        %352 = vmatmul.mubr.f32.gmra.mrb[0].mxu0 %v250
        %v353 = vpop.f32.mrb[0].mxu0
        %v354 = vadd.f32 %v226, %v353
        %v355 = vpop.f32.mrb[0].mxu0
        %356 = vdwg.mxu0
        %v357 = vtanh.pop %v319
        %v358 = vtanh.pop %v324
        %v359 = vtanh.pop %v329
        %v360 = vtanh.pop %v334
        %v361 = vtanh.pop %v339
        %v362 = vtanh.pop %v344
        %v363 = vtanh.pop %v349
        %v364 = vtanh.pop %v354
        %v365 = vlaneseq
        %v366 = vshrl.u32 %v365, 7
        %v367 = vsub.s32 1, %v366
        %v368 = vrot.slane %v214, %v367
        %369 = vmatprep.subr.mxu0 0.0
        %370 = vmatpush1.msra.mxu0 %v182
        %371 = vmatprep.subr.mxu0 0.0
        %372 = vmatpush1.msra.mxu0 %v183
        %373 = vmatprep.subr.mxu0 0.0
        %374 = vmatpush1.msra.mxu0 %v184
        %375 = vmatprep.subr.mxu0 0.0
        %376 = vmatpush1.msra.mxu0 %v185
        %377 = vmatprep.subr.mxu0 0.0
        %378 = vmatpush1.msra.mxu0 %v186
        %379 = vmatprep.subr.mxu0 0.0
        %380 = vmatpush1.msra.mxu0 %v187
        %381 = vmatprep.subr.mxu0 0.0
        %382 = vmatpush1.msra.mxu0 %v188
        %383 = vmatprep.subr.mxu0 0.0
        %384 = vmatpush1.msra.mxu0 %v189
        %385 = vmatprep.subr.mxu0 0.0
        %386 = vmatpush1.msra.mxu0 %v190
        %387 = vmatprep.subr.mxu0 0.0
        %388 = vmatpush1.msra.mxu0 %v191
        %389 = vmatprep.subr.mxu0 0.0
        %390 = vmatpush1.msra.mxu0 %v192
        %391 = vmatprep.subr.mxu0 0.0
        %392 = vmatpush1.msra.mxu0 %v193
        %393 = vmatprep.subr.mxu0 0.0
        %394 = vmatpush1.msra.mxu0 %v194
        %395 = vmatprep.subr.mxu0 0.0
        %396 = vmatpush1.msra.mxu0 %v195
        %397 = vmatprep.subr.mxu0 0.0
        %398 = vmatpush1.msra.mxu0 %v196
        %399 = vmatprep.subr.mxu0 0.0
        %400 = vmatpush1.msra.mxu0 %v197
        %401 = vmatprep.subr.mxu0 0.0
        %402 = vmatpush1.msra.mxu0 0.0
        %403 = vmatprep.subr.mxu0 0.0
        %404 = vmatpush1.msra.mxu0 0.0
        %405 = vmatprep.subr.mxu0 0.0
        %406 = vmatpush1.msra.mxu0 0.0
        %407 = vmatprep.subr.mxu0 0.0
        %408 = vmatpush1.msra.mxu0 0.0
        %409 = vmatprep.subr.mxu0 0.0
        %410 = vmatpush1.msra.mxu0 0.0
        %411 = vmatprep.subr.mxu0 0.0
        %412 = vmatpush1.msra.mxu0 0.0
        %413 = vmatprep.subr.mxu0 0.0
        %414 = vmatpush1.msra.mxu0 0.0
        %415 = vmatprep.subr.mxu0 0.0
        %416 = vmatpush1.msra.mxu0 0.0
        %417 = vmatprep.subr.mxu0 0.0
        %418 = vmatpush1.msra.mxu0 0.0
        %419 = vmatprep.subr.mxu0 0.0
        %420 = vmatpush1.msra.mxu0 0.0
        %421 = vmatprep.subr.mxu0 0.0
        %422 = vmatpush1.msra.mxu0 0.0
        %423 = vmatprep.subr.mxu0 0.0
        %424 = vmatpush1.msra.mxu0 0.0
        %425 = vmatprep.subr.mxu0 0.0
        %426 = vmatpush1.msra.mxu0 0.0
        %427 = vmatprep.subr.mxu0 0.0
        %428 = vmatpush1.msra.mxu0 0.0
        %429 = vmatprep.subr.mxu0 0.0
        %430 = vmatpush1.msra.mxu0 0.0
        %431 = vmatprep.subr.mxu0 0.0
        %432 = vmatpush1.msra.mxu0 0.0
        %433 = vmatprep.mubr.f32.mxu0 0.0
        %434 = vmatmul.mubr.f32.gmra.mrb[0].mxu0 %v357
        %v435 = vpop.f32.mrb[0].mxu0
        %v436 = vadd.f32 %v368, %v435
        %v437 = vpop.f32.mrb[0].mxu0
        %438 = vmatprep.mubr.f32.mxu0 0.0
        %439 = vmatmul.mubr.f32.gmra.mrb[0].mxu0 %v358
        %v440 = vpop.f32.mrb[0].mxu0
        %v441 = vadd.f32 %v368, %v440
        %v442 = vpop.f32.mrb[0].mxu0
        %443 = vmatprep.mubr.f32.mxu0 0.0
        %444 = vmatmul.mubr.f32.gmra.mrb[0].mxu0 %v359
        %v445 = vpop.f32.mrb[0].mxu0
        %v446 = vadd.f32 %v368, %v445
        %v447 = vpop.f32.mrb[0].mxu0
        %448 = vmatprep.mubr.f32.mxu0 0.0
        %449 = vmatmul.mubr.f32.gmra.mrb[0].mxu0 %v360
        %v450 = vpop.f32.mrb[0].mxu0
        %v451 = vadd.f32 %v368, %v450
        %v452 = vpop.f32.mrb[0].mxu0
        %453 = vmatprep.mubr.f32.mxu0 0.0
        %454 = vmatmul.mubr.f32.gmra.mrb[0].mxu0 %v361
        %v455 = vpop.f32.mrb[0].mxu0
        %v456 = vadd.f32 %v368, %v455
        %v457 = vpop.f32.mrb[0].mxu0
        %458 = vmatprep.mubr.f32.mxu0 0.0
        %459 = vmatmul.mubr.f32.gmra.mrb[0].mxu0 %v362
        %v460 = vpop.f32.mrb[0].mxu0
        %v461 = vadd.f32 %v368, %v460
        %v462 = vpop.f32.mrb[0].mxu0
        %463 = vmatprep.mubr.f32.mxu0 0.0
        %464 = vmatmul.mubr.f32.gmra.mrb[0].mxu0 %v363
        %v465 = vpop.f32.mrb[0].mxu0
        %v466 = vadd.f32 %v368, %v465
        %v467 = vpop.f32.mrb[0].mxu0
        %468 = vmatprep.mubr.f32.mxu0 0.0
        %469 = vmatmul.mubr.f32.gmra.mrb[0].mxu0 %v364
        %v470 = vpop.f32.mrb[0].mxu0
        %v471 = vadd.f32 %v368, %v470
        %v472 = vpop.f32.mrb[0].mxu0
        %473 = vdwg.mxu0
        %v474 = vtanh.pop %v436
        %v475 = vtanh.pop %v441
        %v476 = vtanh.pop %v446
        %v477 = vtanh.pop %v451
        %v478 = vtanh.pop %v456
        %v479 = vtanh.pop %v461
        %v480 = vtanh.pop %v466
        %v481 = vtanh.pop %v471
        %v482 = vlaneseq
        %v483 = vshrl.u32 %v482, 7
        %v484 = vsub.s32 2, %v483
        %v485 = vrot.slane %v214, %v484
        %486 = vmatprep.subr.mxu0 0.0
        %487 = vmatpush1.msra.mxu0 %v198
        %488 = vmatprep.subr.mxu0 0.0
        %489 = vmatpush1.msra.mxu0 %v199
        %490 = vmatprep.subr.mxu0 0.0
        %491 = vmatpush1.msra.mxu0 %v200
        %492 = vmatprep.subr.mxu0 0.0
        %493 = vmatpush1.msra.mxu0 %v201
        %494 = vmatprep.subr.mxu0 0.0
        %495 = vmatpush1.msra.mxu0 %v202
        %496 = vmatprep.subr.mxu0 0.0
        %497 = vmatpush1.msra.mxu0 %v203
        %498 = vmatprep.subr.mxu0 0.0
        %499 = vmatpush1.msra.mxu0 %v204
        %500 = vmatprep.subr.mxu0 0.0
        %501 = vmatpush1.msra.mxu0 %v205
        %502 = vmatprep.subr.mxu0 0.0
        %503 = vmatpush1.msra.mxu0 %v206
        %504 = vmatprep.subr.mxu0 0.0
        %505 = vmatpush1.msra.mxu0 %v207
        %506 = vmatprep.subr.mxu0 0.0
        %507 = vmatpush1.msra.mxu0 %v208
        %508 = vmatprep.subr.mxu0 0.0
        %509 = vmatpush1.msra.mxu0 %v209
        %510 = vmatprep.subr.mxu0 0.0
        %511 = vmatpush1.msra.mxu0 %v210
        %512 = vmatprep.subr.mxu0 0.0
        %513 = vmatpush1.msra.mxu0 %v211
        %514 = vmatprep.subr.mxu0 0.0
        %515 = vmatpush1.msra.mxu0 %v212
        %516 = vmatprep.subr.mxu0 0.0
        %517 = vmatpush1.msra.mxu0 %v213
        %518 = vmatprep.subr.mxu0 0.0
        %519 = vmatpush1.msra.mxu0 0.0
        %520 = vmatprep.subr.mxu0 0.0
        %521 = vmatpush1.msra.mxu0 0.0
        %522 = vmatprep.subr.mxu0 0.0
        %523 = vmatpush1.msra.mxu0 0.0
        %524 = vmatprep.subr.mxu0 0.0
        %525 = vmatpush1.msra.mxu0 0.0
        %526 = vmatprep.subr.mxu0 0.0
        %527 = vmatpush1.msra.mxu0 0.0
        %528 = vmatprep.subr.mxu0 0.0
        %529 = vmatpush1.msra.mxu0 0.0
        %530 = vmatprep.subr.mxu0 0.0
        %531 = vmatpush1.msra.mxu0 0.0
        %532 = vmatprep.subr.mxu0 0.0
        %533 = vmatpush1.msra.mxu0 0.0
        %534 = vmatprep.subr.mxu0 0.0
        %535 = vmatpush1.msra.mxu0 0.0
        %536 = vmatprep.subr.mxu0 0.0
        %537 = vmatpush1.msra.mxu0 0.0
        %538 = vmatprep.subr.mxu0 0.0
        %539 = vmatpush1.msra.mxu0 0.0
        %540 = vmatprep.subr.mxu0 0.0
        %541 = vmatpush1.msra.mxu0 0.0
        %542 = vmatprep.subr.mxu0 0.0
        %543 = vmatpush1.msra.mxu0 0.0
        %544 = vmatprep.subr.mxu0 0.0
        %545 = vmatpush1.msra.mxu0 0.0
        %546 = vmatprep.subr.mxu0 0.0
        %547 = vmatpush1.msra.mxu0 0.0
        %548 = vmatprep.subr.mxu0 0.0
        %549 = vmatpush1.msra.mxu0 0.0
        %550 = vmatprep.mubr.f32.mxu0 0.0
        %551 = vmatmul.mubr.f32.gmra.mrb[0].mxu0 %v474
        %v552 = vpop.f32.mrb[0].mxu0
        %v553 = vadd.f32 %v485, %v552
        %v554 = vpop.f32.mrb[0].mxu0
        %555 = vmatprep.mubr.f32.mxu0 0.0
        %556 = vmatmul.mubr.f32.gmra.mrb[0].mxu0 %v475
        %v557 = vpop.f32.mrb[0].mxu0
        %v558 = vadd.f32 %v485, %v557
        %v559 = vpop.f32.mrb[0].mxu0
        %560 = vmatprep.mubr.f32.mxu0 0.0
        %561 = vmatmul.mubr.f32.gmra.mrb[0].mxu0 %v476
        %v562 = vpop.f32.mrb[0].mxu0
        %v563 = vadd.f32 %v485, %v562
        %v564 = vpop.f32.mrb[0].mxu0
        %565 = vmatprep.mubr.f32.mxu0 0.0
        %566 = vmatmul.mubr.f32.gmra.mrb[0].mxu0 %v477
        %v567 = vpop.f32.mrb[0].mxu0
        %v568 = vadd.f32 %v485, %v567
        %v569 = vpop.f32.mrb[0].mxu0
        %570 = vmatprep.mubr.f32.mxu0 0.0
        %571 = vmatmul.mubr.f32.gmra.mrb[0].mxu0 %v478
        %v572 = vpop.f32.mrb[0].mxu0
        %v573 = vadd.f32 %v485, %v572
        %v574 = vpop.f32.mrb[0].mxu0
        %575 = vmatprep.mubr.f32.mxu0 0.0
        %576 = vmatmul.mubr.f32.gmra.mrb[0].mxu0 %v479
        %v577 = vpop.f32.mrb[0].mxu0
        %v578 = vadd.f32 %v485, %v577
        %v579 = vpop.f32.mrb[0].mxu0
        %580 = vmatprep.mubr.f32.mxu0 0.0
        %581 = vmatmul.mubr.f32.gmra.mrb[0].mxu0 %v480
        %v582 = vpop.f32.mrb[0].mxu0
        %v583 = vadd.f32 %v485, %v582
        %v584 = vpop.f32.mrb[0].mxu0
        %585 = vmatprep.mubr.f32.mxu0 0.0
        %586 = vmatmul.mubr.f32.gmra.mrb[0].mxu0 %v481
        %v587 = vpop.f32.mrb[0].mxu0
        %v588 = vadd.f32 %v485, %v587
        %v589 = vpop.f32.mrb[0].mxu0
        %590 = vdwg.mxu0
        %v591 = vtanh.pop %v553
        %v592 = vtanh.pop %v558
        %v593 = vtanh.pop %v563
        %v594 = vtanh.pop %v568
        %v595 = vtanh.pop %v573
        %v596 = vtanh.pop %v578
        %v597 = vtanh.pop %v583
        %v598 = vtanh.pop %v588
        %599 = vst [vmem:[%s160] sm:$0xff] %v591
        %600 = vst [vmem:[%s160 + $0x8] sm:$0xff] %v592
        %601 = vst [vmem:[%s160 + $0x10] sm:$0xff] %v593
        %602 = vst [vmem:[%s160 + $0x18] sm:$0xff] %v594
        %603 = vst [vmem:[%s160 + $0x20] sm:$0xff] %v595
        %604 = vst [vmem:[%s160 + $0x28] sm:$0xff] %v596
        %605 = vst [vmem:[%s160 + $0x30] sm:$0xff] %v597
        %606 = vst [vmem:[%s160 + $0x38] sm:$0xff] %v598
        %s607 = sand.u32 %s69, 1
        %s608 = sand.u32 %s69, 1
        %s609 = smul.addr %s608, 64
        %s610 = scalar_lea.vmem [#allocation4], %s609
        // Predicated region
        $region33: #{state_independent_policy_forward.1} parent=27 // pred_check
          %p611 = pneg %p79
        $region34: #{state_independent_policy_forward.1} parent=27 // pred_check_branch
          %613 = sbr.rel (%p611) target = $region36
        $region35: #{state_independent_policy_forward.1} parent=27 // pred_region
          %s614 = smul.u32 8, %s14
          %s615 = ssub.s32 25, %s614
          %p616 = scmp.lt.s32.totalorder %s615, 8
          %s617 = scalar_select %p616, %s615, 8
          %s618 = smul.u32 128, %s617
          %p619 = scmp.ne.s32.totalorder 0, %s618
          %s620 = smul.addr %s614, 8
          %s621 = scalar_lea.vmem %s2, %s620
          // Predicated region
          $region37: #{state_independent_policy_forward.1} parent=35 // pred_check
            %p622 = pneg %p619
          $region38: #{state_independent_policy_forward.1} parent=35 // pred_check_branch
            %624 = sbr.rel (%p622) target = $region40
          $region39: #{state_independent_policy_forward.1} parent=35 // pred_region
            // Predicated region
            $region41: #{state_independent_policy_forward.1} parent=39 // pred_check
              _
            $region42: #{state_independent_policy_forward.1} parent=39 // pred_check_branch
              %626 = sbr.rel (0) target = $region44
            $region43: #{state_independent_policy_forward.1} parent=39 // pred_region
              // Predicated region
              $region63: #{state_independent_policy_forward.1} parent=43 // pred_check
                _
              $region64: #{state_independent_policy_forward.1} parent=43 // pred_check_branch
                %689 = sbr.rel (0) target = $region66
              $region65: #{state_independent_policy_forward.1} parent=43 // pred_region
                %s690 = sshrl.u32 %s617, 3
                // While loop
                $region67: #{state_independent_policy_forward.1} parent=65 // loop_pre_header
                  _
                $region68: #{state_independent_policy_forward.1} parent=65 // loop_header
                  %s692 = sphi 0, %s694
                  %p693 = scmp.ge.s32.totalorder %s692, %s690
                  %s697 = sphi 0, %s718
                  %s698 = sphi %s610, %s721
                  %s699 = sphi %s621, %s722
                $region69: #{state_independent_policy_forward.1} parent=65 // loop_header_branch
                  %696 = sbr.rel (%p693) target = $region73
                $region70: #{state_independent_policy_forward.1} parent=65 // loop_body
                  %v700 = vld [vmem:[%s698] sm:$0xff]
                  %701 = vst [vmem:[%s699] sm:$0xff] %v700
                  %v702 = vld [vmem:[%s698 + $0x8] sm:$0xff]
                  %703 = vst [vmem:[%s699 + $0x8] sm:$0xff] %v702
                  %v704 = vld [vmem:[%s698 + $0x10] sm:$0xff]
                  %705 = vst [vmem:[%s699 + $0x10] sm:$0xff] %v704
                  %v706 = vld [vmem:[%s698 + $0x18] sm:$0xff]
                  %707 = vst [vmem:[%s699 + $0x18] sm:$0xff] %v706
                  %v708 = vld [vmem:[%s698 + $0x20] sm:$0xff]
                  %709 = vst [vmem:[%s699 + $0x20] sm:$0xff] %v708
                  %v710 = vld [vmem:[%s698 + $0x28] sm:$0xff]
                  %711 = vst [vmem:[%s699 + $0x28] sm:$0xff] %v710
                  %v712 = vld [vmem:[%s698 + $0x30] sm:$0xff]
                  %713 = vst [vmem:[%s699 + $0x30] sm:$0xff] %v712
                  %v714 = vld [vmem:[%s698 + $0x38] sm:$0xff]
                  %715 = vst [vmem:[%s699 + $0x38] sm:$0xff] %v714
                  %s716 = sadd.s32 1, %s697
                  %p717 = scmp.ge.s32.totalorder %s716, %s690
                  %s718 = scalar_select %p717, 0, %s716
                  %s719 = smul.u32 %s718, 64
                  %s720 = smul.u32 %s718, 64
                  %s721 = scalar_lea.vmem %s610, %s719 [#allocation4]
                  %s722 = scalar_lea.vmem %s621, %s720
                $region71: #{state_independent_policy_forward.1} parent=65 // loop_footer
                  %s694 = sadd.s32 %s692, 1
                $region72: #{state_independent_policy_forward.1} parent=65 // loop_footer_branch
                  %691 = sbr.rel target = $region68
                $region73: #{state_independent_policy_forward.1} parent=65 // loop_exit
                  _
                %s723 = sshrl.u32 %s617, 3
                %s724 = sand.u32 %s617, 7
                %s725 = smul.u32 %s723, 8
                %s726 = smul.u32 8, %s725
                %s727 = scalar_lea.vmem %s610, %s726 [#allocation4]
                %s728 = smul.u32 8, %s725
                %s729 = scalar_lea.vmem %s621, %s728
                // While loop
                $region74: #{state_independent_policy_forward.1} parent=65 // loop_pre_header
                  _
                $region75: #{state_independent_policy_forward.1} parent=65 // loop_header
                  %s731 = sphi 0, %s733
                  %p732 = scmp.ge.s32.totalorder %s731, %s724
                  %s736 = sphi 0, %s743
                  %s737 = sphi %s727, %s746
                  %s738 = sphi %s729, %s747
                $region76: #{state_independent_policy_forward.1} parent=65 // loop_header_branch
                  %735 = sbr.rel (%p732) target = $region80
                $region77: #{state_independent_policy_forward.1} parent=65 // loop_body
                  %v739 = vld [vmem:[%s737] sm:$0xff]
                  %740 = vst [vmem:[%s738] sm:$0xff] %v739
                  %s741 = sadd.s32 1, %s736
                  %p742 = scmp.ge.s32.totalorder %s741, %s724
                  %s743 = scalar_select %p742, 0, %s741
                  %s744 = smul.u32 %s743, 8
                  %s745 = smul.u32 %s743, 8
                  %s746 = scalar_lea.vmem %s727, %s744 [#allocation4]
                  %s747 = scalar_lea.vmem %s729, %s745
                $region78: #{state_independent_policy_forward.1} parent=65 // loop_footer
                  %s733 = sadd.s32 %s731, 1
                $region79: #{state_independent_policy_forward.1} parent=65 // loop_footer_branch
                  %730 = sbr.rel target = $region75
                $region80: #{state_independent_policy_forward.1} parent=65 // loop_exit
                  _
              $region66: #{state_independent_policy_forward.1} parent=43 // pred_fallthru
                _
              // Predicated region
              $region81: #{state_independent_policy_forward.1} parent=43 // pred_check
                _
              $region82: #{state_independent_policy_forward.1} parent=43 // pred_check_branch
                %749 = sbr.rel target = $region84
              $region83: #{state_independent_policy_forward.1} parent=43 // pred_region
                _
              $region84: #{state_independent_policy_forward.1} parent=43 // pred_fallthru
                _
            $region44: #{state_independent_policy_forward.1} parent=39 // pred_fallthru
              _
            // Predicated region
            $region45: #{state_independent_policy_forward.1} parent=39 // pred_check
              _
            $region46: #{state_independent_policy_forward.1} parent=39 // pred_check_branch
              %628 = sbr.rel target = $region48
            $region47: #{state_independent_policy_forward.1} parent=39 // pred_region
              %s630 = sshrl.u32 %s617, 3
              // While loop
              $region49: #{state_independent_policy_forward.1} parent=47 // loop_pre_header
                _
              $region50: #{state_independent_policy_forward.1} parent=47 // loop_header
                %s632 = sphi 0, %s634
                %p633 = scmp.ge.s32.totalorder %s632, %s630
                %s637 = sphi 0, %s658
                %s638 = sphi %s610, %s661
                %s639 = sphi %s621, %s662
              $region51: #{state_independent_policy_forward.1} parent=47 // loop_header_branch
                %636 = sbr.rel (%p633) target = $region55
              $region52: #{state_independent_policy_forward.1} parent=47 // loop_body
                %v640 = vld [vmem:[%s638] sm:$0xff]
                %641 = vst [vmem:[%s639] sm:$0xff] %v640
                %v642 = vld [vmem:[%s638 + $0x8] sm:$0xff]
                %643 = vst [vmem:[%s639 + $0x8] sm:$0xff] %v642
                %v644 = vld [vmem:[%s638 + $0x10] sm:$0xff]
                %645 = vst [vmem:[%s639 + $0x10] sm:$0xff] %v644
                %v646 = vld [vmem:[%s638 + $0x18] sm:$0xff]
                %647 = vst [vmem:[%s639 + $0x18] sm:$0xff] %v646
                %v648 = vld [vmem:[%s638 + $0x20] sm:$0xff]
                %649 = vst [vmem:[%s639 + $0x20] sm:$0xff] %v648
                %v650 = vld [vmem:[%s638 + $0x28] sm:$0xff]
                %651 = vst [vmem:[%s639 + $0x28] sm:$0xff] %v650
                %v652 = vld [vmem:[%s638 + $0x30] sm:$0xff]
                %653 = vst [vmem:[%s639 + $0x30] sm:$0xff] %v652
                %v654 = vld [vmem:[%s638 + $0x38] sm:$0xff]
                %655 = vst [vmem:[%s639 + $0x38] sm:$0xff] %v654
                %s656 = sadd.s32 1, %s637
                %p657 = scmp.ge.s32.totalorder %s656, %s630
                %s658 = scalar_select %p657, 0, %s656
                %s659 = smul.u32 %s658, 64
                %s660 = smul.u32 %s658, 64
                %s661 = scalar_lea.vmem %s610, %s659 [#allocation4]
                %s662 = scalar_lea.vmem %s621, %s660
              $region53: #{state_independent_policy_forward.1} parent=47 // loop_footer
                %s634 = sadd.s32 %s632, 1
              $region54: #{state_independent_policy_forward.1} parent=47 // loop_footer_branch
                %631 = sbr.rel target = $region50
              $region55: #{state_independent_policy_forward.1} parent=47 // loop_exit
                _
              %s663 = sshrl.u32 %s617, 3
              %s664 = sand.u32 %s617, 7
              %s665 = smul.u32 %s663, 8
              %s666 = smul.u32 8, %s665
              %s667 = scalar_lea.vmem %s610, %s666 [#allocation4]
              %s668 = smul.u32 8, %s665
              %s669 = scalar_lea.vmem %s621, %s668
              // While loop
              $region56: #{state_independent_policy_forward.1} parent=47 // loop_pre_header
                _
              $region57: #{state_independent_policy_forward.1} parent=47 // loop_header
                %s671 = sphi 0, %s673
                %p672 = scmp.ge.s32.totalorder %s671, %s664
                %s676 = sphi 0, %s683
                %s677 = sphi %s667, %s686
                %s678 = sphi %s669, %s687
              $region58: #{state_independent_policy_forward.1} parent=47 // loop_header_branch
                %675 = sbr.rel (%p672) target = $region62
              $region59: #{state_independent_policy_forward.1} parent=47 // loop_body
                %v679 = vld [vmem:[%s677] sm:$0xff]
                %680 = vst [vmem:[%s678] sm:$0xff] %v679
                %s681 = sadd.s32 1, %s676
                %p682 = scmp.ge.s32.totalorder %s681, %s664
                %s683 = scalar_select %p682, 0, %s681
                %s684 = smul.u32 %s683, 8
                %s685 = smul.u32 %s683, 8
                %s686 = scalar_lea.vmem %s667, %s684 [#allocation4]
                %s687 = scalar_lea.vmem %s669, %s685
              $region60: #{state_independent_policy_forward.1} parent=47 // loop_footer
                %s673 = sadd.s32 %s671, 1
              $region61: #{state_independent_policy_forward.1} parent=47 // loop_footer_branch
                %670 = sbr.rel target = $region57
              $region62: #{state_independent_policy_forward.1} parent=47 // loop_exit
                _
            $region48: #{state_independent_policy_forward.1} parent=39 // pred_fallthru
              _
          $region40: #{state_independent_policy_forward.1} parent=35 // pred_fallthru
            _
          %750 = vnop
        $region36: #{state_independent_policy_forward.1} parent=27 // pred_fallthru
          _
      $region28: #{state_independent_policy_forward.1} parent=5 // pred_fallthru
        _
      %p751 = scmp.le.s32.totalorder 2, %s9
      // Predicated region
      $region85: #{state_independent_policy_forward.1} parent=5 // pred_check
        %p752 = pneg %p751
      $region86: #{state_independent_policy_forward.1} parent=5 // pred_check_branch
        %754 = sbr.rel (%p752) target = $region88
      $region87: #{state_independent_policy_forward.1} parent=5 // pred_region
        %s755 = ssub.s32 %s9, 2
        // Predicated region
        $region89: #{state_independent_policy_forward.1} parent=87 // pred_check
          %p756 = pneg %p85
        $region90: #{state_independent_policy_forward.1} parent=87 // pred_check_branch
          %758 = sbr.rel (%p756) target = $region92
        $region91: #{state_independent_policy_forward.1} parent=87 // pred_region
          %s759 = sand.u32 %s70, 1
          %s760 = sand.u32 %s70, 1
          %s761 = smul.addr %s760, 64
          %s762 = scalar_lea.vmem [#allocation4], %s761
        $region92: #{state_independent_policy_forward.1} parent=87 // pred_fallthru
          _
      $region88: #{state_independent_policy_forward.1} parent=5 // pred_fallthru
        _
    $region6: #{state_independent_policy_forward.1} parent=1 // loop_footer
      %s13 = sadd.s32 1, %s9
    $region7: #{state_independent_policy_forward.1} parent=1 // loop_footer_branch
      %8 = sbr.rel target = $region3
    $region8: #{state_independent_policy_forward.1} parent=1 // loop_exit
      _
    %763 = vsyncpa [#allocation3], 1
    %s764 = scalar_lea.sflag [#allocation3], 1
    %765 = vsyncpa %s764, 1

</llo_original>
